<compile_context>
chip_gen: v7x
topology: tpu7x:2x2x1
jax: 0.10.0
libtpu: 0.0.40
codegen_flags: <defaults>
</compile_context>

<pallas_src>
import functools

import jax
import jax.numpy as jnp
from jax.experimental import pallas as pl
from jax.experimental.pallas import tpu as pltpu


EMB_DIMS = 32
HIDDEN = 128
EPS = 1e-12          # same eps as torch.nn.functional.normalize default
_LANE = 128
_SUBLANE = 8


def _cdiv(a, b):
    return -(-a // b)


def _round_up(x, m):
    return _cdiv(x, m) * m


# ----------------------------------------------------------------------------
# Kernel
# ----------------------------------------------------------------------------
def _user_tower_kernel(g_ref, a_ref, o_ref, ew1_ref, b1_ref, w2_ref, b2_ref,
                       out_ref):
    """Fused (gather+concat+Linear1) + ReLU + Linear2 + L2-normalize, one tile.

    g_ref/a_ref/o_ref : (TB, 1)  int32 row indices (already offset into EW1)
    ew1_ref           : (R, 128) precomputed block-diagonal (tables @ W1)
    b1_ref            : (1, 128)
    w2_ref            : (128, 32)
    b2_ref            : (1, 32)
    out_ref           : (TB, 32)
    """
    tb = g_ref.shape[0]
    rows = ew1_ref.shape[0]

    # Combined one-hot selecting the gender, age and occupation rows of EW1;
    # one MXU matmul then yields the layer-1 pre-activation directly.
    r_iota = jax.lax.broadcasted_iota(jnp.int32, (tb, rows), 1)
    onehot = ((r_iota == g_ref[...])
              | (r_iota == a_ref[...])
              | (r_iota == o_ref[...])).astype(jnp.float32)

    h = jnp.dot(onehot, ew1_ref[...],
                preferred_element_type=jnp.float32) + b1_ref[...]
    h = jnp.maximum(h, 0.0)                                          # ReLU
    y = jnp.dot(h, w2_ref[...],
                preferred_element_type=jnp.float32) + b2_ref[...]

    # F.normalize(y, dim=-1) == y / max(||y||, eps) == y * rsqrt(max(||y||^2, eps^2))
    sum_sq = jnp.sum(y * y, axis=-1, keepdims=True)
    inv_norm = jax.lax.rsqrt(jnp.maximum(sum_sq, EPS * EPS))
    out_ref[...] = (y * inv_norm).astype(out_ref.dtype)


# ----------------------------------------------------------------------------
# pallas_call wrapper
# ----------------------------------------------------------------------------
@functools.partial(jax.jit, static_argnames=("tile_b",))
def _user_tower_pallas(g_idx, a_idx, o_idx, ew1, b1, w2, b2, *, tile_b):
    b_pad = g_idx.shape[0]
    rows = ew1.shape[0]
    out_dim = w2.shape[1]
    grid = (b_pad // tile_b,)

    flops = 2 * b_pad * (rows * HIDDEN + HIDDEN * out_dim)
    bytes_accessed = 4 * (3 * b_pad + ew1.size + b1.size + w2.size + b2.size
                          + b_pad * out_dim)

    return pl.pallas_call(
        _user_tower_kernel,
        out_shape=jax.ShapeDtypeStruct((b_pad, out_dim), jnp.float32),
        grid_spec=pltpu.PrefetchScalarGridSpec(
            num_scalar_prefetch=0,
            grid=grid,
            in_specs=[
                pl.BlockSpec((tile_b, 1), lambda i: (i, 0)),        # gender idx
                pl.BlockSpec((tile_b, 1), lambda i: (i, 0)),        # age idx
                pl.BlockSpec((tile_b, 1), lambda i: (i, 0)),        # occupation idx
                pl.BlockSpec((rows, HIDDEN), lambda i: (0, 0)),     # EW1 (fused)
                pl.BlockSpec((1, HIDDEN), lambda i: (0, 0)),        # b1
                pl.BlockSpec((HIDDEN, out_dim), lambda i: (0, 0)),  # w2
                pl.BlockSpec((1, out_dim), lambda i: (0, 0)),       # b2
            ],
            out_specs=pl.BlockSpec((tile_b, out_dim), lambda i: (i, 0)),
        ),
        compiler_params=pltpu.CompilerParams(
            dimension_semantics=("parallel",),
        ),
        cost_estimate=pl.CostEstimate(
            flops=flops,
            transcendentals=b_pad,          # one rsqrt per row
            bytes_accessed=bytes_accessed,
        ),
    )(g_idx, a_idx, o_idx, ew1, b1, w2, b2)


def _choose_tiling(batch):
    """Pick (tile_b, padded_batch): tiles up to 256 rows, >=2 grid steps when
    the batch allows so both TensorCores on megacore / v7x chips get work."""
    b8 = _round_up(max(batch, 1), _SUBLANE)
    n_tiles = _cdiv(b8, 256)
    if n_tiles == 1 and b8 >= 2 * _SUBLANE:
        n_tiles = 2
    tile_b = _round_up(_cdiv(b8, n_tiles), _SUBLANE)
    return tile_b, tile_b * n_tiles


# ----------------------------------------------------------------------------
# Parameters
# ----------------------------------------------------------------------------
def init_user_tower_params(key, num_genders, num_ages, num_occupations,
                           emb_dims=EMB_DIMS):
    """Deterministic synthetic params (shapes mirror the torch module;
    linear weights stored as (in, out) = transpose of nn.Linear.weight)."""
    ks = jax.random.split(key, 7)
    scale = 0.02
    return {
        "gender_emb": scale * jax.random.normal(ks[0], (num_genders, emb_dims), jnp.float32),
        "age_emb": scale * jax.random.normal(ks[1], (num_ages, emb_dims), jnp.float32),
        "occupation_emb": scale * jax.random.normal(ks[2], (num_occupations, emb_dims), jnp.float32),
        "w1": scale * jax.random.normal(ks[3], (emb_dims * 3, HIDDEN), jnp.float32),
        "b1": scale * jax.random.normal(ks[4], (1, HIDDEN), jnp.float32),
        "w2": scale * jax.random.normal(ks[5], (HIDDEN, emb_dims), jnp.float32),
        "b2": scale * jax.random.normal(ks[6], (1, emb_dims), jnp.float32),
    }


def prepare_user_tower_params(params):
    """Fuse the embedding tables with the first Linear layer:
    EW1 is block-diagonal (rows = padded gender/age/occupation tables), where
    EW1[row of table t] = table_t[row] @ W1[t*emb : (t+1)*emb, :].  A one-hot
    matmul against EW1 then equals concat(gather(...)) @ W1 exactly."""
    ge = params["gender_emb"]
    ae = params["age_emb"]
    oe = params["occupation_emb"]
    ng, d = ge.shape
    na = ae.shape[0]
    no = oe.shape[0]
    ng_p = _round_up(ng, _SUBLANE)
    na_p = _round_up(na, _SUBLANE)
    no_p = _round_up(no, _SUBLANE)
    rows = ng_p + na_p + no_p                      # multiple of 8

    w1 = params["w1"]
    hp = jax.lax.Precision.HIGHEST
    ew1 = jnp.zeros((rows, HIDDEN), jnp.float32)
    ew1 = ew1.at[0:ng].set(jnp.dot(ge, w1[0:d], precision=hp))
    ew1 = ew1.at[ng_p:ng_p + na].set(jnp.dot(ae, w1[d:2 * d], precision=hp))
    ew1 = ew1.at[ng_p + na_p:ng_p + na_p + no].set(
        jnp.dot(oe, w1[2 * d:3 * d], precision=hp))

    return {
        "ew1": ew1,
        "b1": params["b1"].reshape(1, HIDDEN),
        "w2": params["w2"],
        "b2": params["b2"].reshape(1, -1),
        "age_off": int(ng_p),
        "occ_off": int(ng_p + na_p),
    }


# ----------------------------------------------------------------------------
# Forward
# ----------------------------------------------------------------------------
def user_tower_forward(prepped, gender, age, occupation):
    batch = gender.shape[0]
    tile_b, b_pad = _choose_tiling(batch)

    def prep_idx(v, off):
        v = v.astype(jnp.int32).reshape(-1, 1) + off
        return jnp.pad(v, ((0, b_pad - batch), (0, 0)))   # pad rows -> row 0

    out = _user_tower_pallas(
        prep_idx(gender, 0),
        prep_idx(age, prepped["age_off"]),
        prep_idx(occupation, prepped["occ_off"]),
        prepped["ew1"], prepped["b1"], prepped["w2"], prepped["b2"],
        tile_b=tile_b)
    return out[:batch]


def _reference_forward(params, gender, age, occupation):
    gvec = jnp.take(params["gender_emb"], gender, axis=0)
    avec = jnp.take(params["age_emb"], age, axis=0)
    ovec = jnp.take(params["occupation_emb"], occupation, axis=0)
    x = jnp.concatenate([gvec, avec, ovec], axis=-1)
    h = jnp.maximum(
        jnp.dot(x, params["w1"], precision=jax.lax.Precision.HIGHEST)
        + params["b1"], 0.0)
    y = (jnp.dot(h, params["w2"], precision=jax.lax.Precision.HIGHEST)
         + params["b2"])
    n = jnp.maximum(jnp.linalg.norm(y, axis=-1, keepdims=True), EPS)
    return y / n


if __name__ == "__main__":
    num_genders, num_ages, num_occupations = 2, 7, 21
    batch = 20   # exercises batch padding and a 2-step "parallel" grid

    key = jax.random.PRNGKey(0)
    pkey, gkey, akey, okey = jax.random.split(key, 4)

    params = init_user_tower_params(pkey, num_genders, num_ages, num_occupations)
    prepped = prepare_user_tower_params(params)

    gender = jax.random.randint(gkey, (batch,), 0, num_genders, dtype=jnp.int32)
    age = jax.random.randint(akey, (batch,), 0, num_ages, dtype=jnp.int32)
    occupation = jax.random.randint(okey, (batch,), 0, num_occupations, dtype=jnp.int32)

    out = user_tower_forward(prepped, gender, age, occupation)
    out = jax.block_until_ready(out)

    ref = _reference_forward(params, gender, age, occupation)
    assert out.shape == (batch, EMB_DIMS)
    assert jnp.allclose(out, ref, atol=1e-5, rtol=1e-5), "mismatch vs reference"

    print("KERNEL_OK")
</pallas_src>

<mosaic_0001>
module attributes {stable_mosaic.version = 11 : i64} {
  func.func @_user_tower_kernel(%arg0: i32, %arg1: memref<16x1xi32, #tpu.memory_space<vmem>>, %arg2: memref<16x1xi32, #tpu.memory_space<vmem>>, %arg3: memref<16x1xi32, #tpu.memory_space<vmem>>, %arg4: memref<40x128xf32, #tpu.memory_space<vmem>>, %arg5: memref<1x128xf32, #tpu.memory_space<vmem>>, %arg6: memref<128x32xf32, #tpu.memory_space<vmem>>, %arg7: memref<1x32xf32, #tpu.memory_space<vmem>>, %arg8: memref<16x32xf32, #tpu.memory_space<vmem>>) attributes {dimension_semantics = [#tpu.dimension_semantics<parallel>], iteration_bounds = array<i64: 2>, scalar_prefetch = 0 : i64, scratch_operands = 0 : i64, tpu.core_type = #tpu.core_type<tc>, window_params = [{transform_indices = @transform_0, window_bounds = array<i64: 16, 1>}, {transform_indices = @transform_1, window_bounds = array<i64: 16, 1>}, {transform_indices = @transform_2, window_bounds = array<i64: 16, 1>}, {pipeline_mode = #tpu.pipeline_mode<synchronous>, transform_indices = @transform_3, window_bounds = array<i64: 40, 128>}, {pipeline_mode = #tpu.pipeline_mode<synchronous>, transform_indices = @transform_4, window_bounds = array<i64: 1, 128>}, {pipeline_mode = #tpu.pipeline_mode<synchronous>, transform_indices = @transform_5, window_bounds = array<i64: 128, 32>}, {pipeline_mode = #tpu.pipeline_mode<synchronous>, transform_indices = @transform_6, window_bounds = array<i64: 1, 32>}, {transform_indices = @transform_7, window_bounds = array<i64: 16, 32>}]} {
    %0 = tpu.iota {dimensions = array<i32: 1>} : vector<16x40xi32>
    %c0 = arith.constant 0 : index
    %c0_0 = arith.constant 0 : index
    %1 = vector.load %arg1[%c0, %c0_0] : memref<16x1xi32, #tpu.memory_space<vmem>>, vector<16x1xi32>
    %2 = vector.broadcast %1 : vector<16x1xi32> to vector<16x40xi32>
    %3 = arith.cmpi eq, %0, %2 : vector<16x40xi32>
    %c0_1 = arith.constant 0 : index
    %c0_2 = arith.constant 0 : index
    %4 = vector.load %arg2[%c0_1, %c0_2] : memref<16x1xi32, #tpu.memory_space<vmem>>, vector<16x1xi32>
    %5 = vector.broadcast %4 : vector<16x1xi32> to vector<16x40xi32>
    %6 = arith.cmpi eq, %0, %5 : vector<16x40xi32>
    %7 = arith.ori %3, %6 : vector<16x40xi1>
    %c0_3 = arith.constant 0 : index
    %c0_4 = arith.constant 0 : index
    %8 = vector.load %arg3[%c0_3, %c0_4] : memref<16x1xi32, #tpu.memory_space<vmem>>, vector<16x1xi32>
    %9 = vector.broadcast %8 : vector<16x1xi32> to vector<16x40xi32>
    %10 = arith.cmpi eq, %0, %9 : vector<16x40xi32>
    %11 = arith.ori %7, %10 : vector<16x40xi1>
    %12 = arith.extui %11 : vector<16x40xi1> to vector<16x40xi32>
    %13 = arith.sitofp %12 : vector<16x40xi32> to vector<16x40xf32>
    %c0_5 = arith.constant 0 : index
    %c0_6 = arith.constant 0 : index
    %14 = vector.load %arg4[%c0_5, %c0_6] : memref<40x128xf32, #tpu.memory_space<vmem>>, vector<40x128xf32>
    %cst = arith.constant dense<0.000000e+00> : vector<16x128xf32>
    %15 = tpu.matmul %13, %14, %cst {dimension_numbers = #tpu.dot_dimension_numbers<[1], [0], [0], [1], [0, 0, 1, 1], [], []>} : vector<16x40xf32>, vector<40x128xf32>, vector<16x128xf32> -> vector<16x128xf32>
    %c0_7 = arith.constant 0 : index
    %c0_8 = arith.constant 0 : index
    %16 = vector.load %arg5[%c0_7, %c0_8] : memref<1x128xf32, #tpu.memory_space<vmem>>, vector<1x128xf32>
    %17 = vector.broadcast %16 : vector<1x128xf32> to vector<16x128xf32>
    %18 = arith.addf %15, %17 : vector<16x128xf32>
    %cst_9 = arith.constant 0.000000e+00 : f32
    %19 = vector.broadcast %cst_9 : f32 to vector<16x128xf32>
    %20 = arith.maximumf %18, %19 : vector<16x128xf32>
    %c0_10 = arith.constant 0 : index
    %c0_11 = arith.constant 0 : index
    %21 = vector.load %arg6[%c0_10, %c0_11] : memref<128x32xf32, #tpu.memory_space<vmem>>, vector<128x32xf32>
    %cst_12 = arith.constant dense<0.000000e+00> : vector<16x32xf32>
    %22 = tpu.matmul %20, %21, %cst_12 {dimension_numbers = #tpu.dot_dimension_numbers<[1], [0], [0], [1], [0, 0, 1, 1], [], []>} : vector<16x128xf32>, vector<128x32xf32>, vector<16x32xf32> -> vector<16x32xf32>
    %c0_13 = arith.constant 0 : index
    %c0_14 = arith.constant 0 : index
    %23 = vector.load %arg7[%c0_13, %c0_14] : memref<1x32xf32, #tpu.memory_space<vmem>>, vector<1x32xf32>
    %24 = vector.broadcast %23 : vector<1x32xf32> to vector<16x32xf32>
    %25 = arith.addf %22, %24 : vector<16x32xf32>
    %26 = arith.mulf %25, %25 : vector<16x32xf32>
    %cst_15 = arith.constant dense<0.000000e+00> : vector<16xf32>
    %27 = vector.multi_reduction <add>, %26, %cst_15 [1] : vector<16x32xf32> to vector<16xf32>
    %28 = vector.shape_cast %27 : vector<16xf32> to vector<16x1xf32>
    %cst_16 = arith.constant 1.000000e-24 : f32
    %29 = vector.broadcast %cst_16 : f32 to vector<16x1xf32>
    %30 = arith.maximumf %28, %29 : vector<16x1xf32>
    %31 = math.rsqrt %30 : vector<16x1xf32>
    %32 = vector.broadcast %31 : vector<16x1xf32> to vector<16x32xf32>
    %33 = arith.mulf %25, %32 : vector<16x32xf32>
    %c0_17 = arith.constant 0 : index
    %c0_18 = arith.constant 0 : index
    %34 = vector.load %arg8[%c0_17, %c0_18] : memref<16x32xf32, #tpu.memory_space<vmem>>, vector<16x32xf32>
    tpu.vector_store %arg8[%c0_17, %c0_18], %33 {strides = array<i32>} : memref<16x32xf32, #tpu.memory_space<vmem>>, vector<16x32xf32>,
    return
  }
  func.func @transform_0(%arg0: i32) -> (i32, i32) {
    %c0_i32 = arith.constant 0 : i32
    %c0_i32_0 = arith.constant 0 : i32
    return %arg0, %c0_i32 : i32, i32
  }
  func.func @transform_1(%arg0: i32) -> (i32, i32) {
    %c0_i32 = arith.constant 0 : i32
    %c0_i32_0 = arith.constant 0 : i32
    return %arg0, %c0_i32 : i32, i32
  }
  func.func @transform_2(%arg0: i32) -> (i32, i32) {
    %c0_i32 = arith.constant 0 : i32
    %c0_i32_0 = arith.constant 0 : i32
    return %arg0, %c0_i32 : i32, i32
  }
  func.func @transform_3(%arg0: i32) -> (i32, i32) {
    %c0_i32 = arith.constant 0 : i32
    %c0_i32_0 = arith.constant 0 : i32
    %c0_i32_1 = arith.constant 0 : i32
    return %c0_i32, %c0_i32_0 : i32, i32
  }
  func.func @transform_4(%arg0: i32) -> (i32, i32) {
    %c0_i32 = arith.constant 0 : i32
    %c0_i32_0 = arith.constant 0 : i32
    %c0_i32_1 = arith.constant 0 : i32
    return %c0_i32, %c0_i32_0 : i32, i32
  }
  func.func @transform_5(%arg0: i32) -> (i32, i32) {
    %c0_i32 = arith.constant 0 : i32
    %c0_i32_0 = arith.constant 0 : i32
    %c0_i32_1 = arith.constant 0 : i32
    return %c0_i32, %c0_i32_0 : i32, i32
  }
  func.func @transform_6(%arg0: i32) -> (i32, i32) {
    %c0_i32 = arith.constant 0 : i32
    %c0_i32_0 = arith.constant 0 : i32
    %c0_i32_1 = arith.constant 0 : i32
    return %c0_i32, %c0_i32_0 : i32, i32
  }
  func.func @transform_7(%arg0: i32) -> (i32, i32) {
    %c0_i32 = arith.constant 0 : i32
    %c0_i32_0 = arith.constant 0 : i32
    return %arg0, %c0_i32 : i32, i32
  }
}

</mosaic_0001>

<llo_original>
// kernel: _user_tower_pallas.1
$region0: #{_user_tower_pallas.1}
  #allocation0 [shape = 'u32[]', space=smem, size = 0x4, offset = 0x4, fixed_abs, tag = 'smem constant byte address 0x4 - core index']
  #allocation1 [shape = 'u32[144,128]{1,0:T(1,128)}', space=vmem, size = 0x12000, scoped, tag = 'internal scratch']
  %s0 = inlined_call_operand.vmem [shape: s32[32,1], index: 0, kind: input, shape index: {}]
  %s1 = inlined_call_operand.vmem [shape: s32[32,1], index: 1, kind: input, shape index: {}]
  %s2 = inlined_call_operand.vmem [shape: s32[32,1], index: 2, kind: input, shape index: {}]
  %s3 = inlined_call_operand.vmem [shape: f32[40,128], index: 3, kind: input, shape index: {}]
  %s4 = inlined_call_operand.vmem [shape: f32[1,128], index: 4, kind: input, shape index: {}]
  %s5 = inlined_call_operand.vmem [shape: f32[128,32], index: 5, kind: input, shape index: {}]
  %s6 = inlined_call_operand.vmem [shape: f32[1,32], index: 6, kind: input, shape index: {}]
  %s7 = inlined_call_operand.hbm [shape: f32[32,32], index: 7, kind: output, shape index: {}]
  %s8 = sld [smem:[#allocation0]]
  $region61: #{_user_tower_pallas.1} parent=0
    _
  %s10 = ssub.s32 1, %s8
  %s11 = scalar_select 0, %s10, %s8
  $region1: #{_user_tower_pallas.1} parent=0
    #allocation2 [shape = 'u8[16384]{0}', space=vmem, size = 0x4000, scoped, tag = 'output window, operand 0']
    #allocation3 [shape = 's32[2]{0}', space=sflag, size = 0x8, scoped, tag = 'scoped memory for _user_tower_pallas.1']
    %12 = vsyncpa [#allocation3], 0
    %s13 = scalar_lea.sflag [#allocation3], 1
    %14 = vsyncpa %s13, 0
    loop: start=0, step=1, limit=4
    $region2: #{_user_tower_pallas.1} parent=1 // loop_pre_header
      _
    $region3: #{_user_tower_pallas.1} parent=1 // loop_header
      %s16 = sphi 0, %s20
      %p17 = scmp.ge.s32.totalorder %s16, 4
      %s26 = sphi 0, %s28
      %s29 = sphi 0, %s26
      %s30 = sphi 0, %s29
      %s46 = sphi 0, %s30
      %s52 = sphi 0, %s54
      %s55 = sphi 0, %s52
      %s56 = sphi 0, %s55
      %s72 = sphi 0, %s56
      %s78 = sphi 0, %s80
      %s81 = sphi 0, %s78
      %s82 = sphi 0, %s81
      %s98 = sphi 0, %s82
      %s102 = sphi 0, %s102
      %s104 = sphi 0, %s102
      %s105 = sphi 0, %s104
      %s119 = sphi 0, %s105
      %s123 = sphi 0, %s123
      %s125 = sphi 0, %s123
      %s126 = sphi 0, %s125
      %s140 = sphi 0, %s126
      %s144 = sphi 0, %s144
      %s146 = sphi 0, %s144
      %s147 = sphi 0, %s146
      %s161 = sphi 0, %s147
      %s165 = sphi 0, %s165
      %s167 = sphi 0, %s165
      %s168 = sphi 0, %s167
      %s182 = sphi 0, %s168
      %s188 = sphi 0, %s190
      %s191 = sphi 0, %s188
      %s192 = sphi 0, %s191
      %s208 = sphi 0, %s192
    $region4: #{_user_tower_pallas.1} parent=1 // loop_header_branch
      %19 = sbr.rel (%p17) target = $region8
    $region5: #{_user_tower_pallas.1} parent=1 // loop_body
      %s21 = ssub.s32 %s16, 1
      %s22 = ssub.s32 %s16, 2
      %s23 = sadd.s32 %s16, 1
      %s24 = ssub.s32 %s16, %s23
      %p25 = scmp.eq.s32.totalorder %s24, 0
      %s27 = sadd.s32 %s26, 1
      %s28 = scalar_select %p25, %s26, %s27
      %p31 = pneg %p25
      %p32 = scmp.eq.s32.totalorder %s16, 1
      %p33 = por %p31, %p32
      %p34 = scmp.ne.s32.totalorder %s26, %s29
      %p35 = scmp.eq.s32.totalorder %s16, 0
      %p36 = por %p34, %p35
      %p37 = scmp.ne.s32.totalorder %s26, %s29
      %p38 = scmp.eq.s32.totalorder %s21, 1
      %p39 = por %p37, %p38
      %p40 = scmp.ne.s32.totalorder %s29, %s30
      %p41 = scmp.eq.s32.totalorder %s21, 0
      %p42 = por %p40, %p41
      %p43 = scmp.ne.s32.totalorder %s29, %s30
      %p44 = scmp.eq.s32.totalorder %s22, 1
      %p45 = por %p43, %p44
      %p47 = scmp.ne.s32.totalorder %s30, %s46
      %p48 = scmp.eq.s32.totalorder %s22, 0
      %p49 = por %p47, %p48
      %s50 = ssub.s32 %s16, %s23
      %p51 = scmp.eq.s32.totalorder %s50, 0
      %s53 = sadd.s32 %s52, 1
      %s54 = scalar_select %p51, %s52, %s53
      %p57 = pneg %p51
      %p58 = scmp.eq.s32.totalorder %s16, 1
      %p59 = por %p57, %p58
      %p60 = scmp.ne.s32.totalorder %s52, %s55
      %p61 = scmp.eq.s32.totalorder %s16, 0
      %p62 = por %p60, %p61
      %p63 = scmp.ne.s32.totalorder %s52, %s55
      %p64 = scmp.eq.s32.totalorder %s21, 1
      %p65 = por %p63, %p64
      %p66 = scmp.ne.s32.totalorder %s55, %s56
      %p67 = scmp.eq.s32.totalorder %s21, 0
      %p68 = por %p66, %p67
      %p69 = scmp.ne.s32.totalorder %s55, %s56
      %p70 = scmp.eq.s32.totalorder %s22, 1
      %p71 = por %p69, %p70
      %p73 = scmp.ne.s32.totalorder %s56, %s72
      %p74 = scmp.eq.s32.totalorder %s22, 0
      %p75 = por %p73, %p74
      %s76 = ssub.s32 %s16, %s23
      %p77 = scmp.eq.s32.totalorder %s76, 0
      %s79 = sadd.s32 %s78, 1
      %s80 = scalar_select %p77, %s78, %s79
      %p83 = pneg %p77
      %p84 = scmp.eq.s32.totalorder %s16, 1
      %p85 = por %p83, %p84
      %p86 = scmp.ne.s32.totalorder %s78, %s81
      %p87 = scmp.eq.s32.totalorder %s16, 0
      %p88 = por %p86, %p87
      %p89 = scmp.ne.s32.totalorder %s78, %s81
      %p90 = scmp.eq.s32.totalorder %s21, 1
      %p91 = por %p89, %p90
      %p92 = scmp.ne.s32.totalorder %s81, %s82
      %p93 = scmp.eq.s32.totalorder %s21, 0
      %p94 = por %p92, %p93
      %p95 = scmp.ne.s32.totalorder %s81, %s82
      %p96 = scmp.eq.s32.totalorder %s22, 1
      %p97 = por %p95, %p96
      %p99 = scmp.ne.s32.totalorder %s82, %s98
      %p100 = scmp.eq.s32.totalorder %s22, 0
      %p101 = por %p99, %p100
      %s103 = sadd.s32 %s102, 1
      %p106 = scmp.eq.s32.totalorder %s16, 1
      %p107 = scmp.ne.s32.totalorder %s102, %s104
      %p108 = scmp.eq.s32.totalorder %s16, 0
      %p109 = por %p107, %p108
      %p110 = scmp.ne.s32.totalorder %s102, %s104
      %p111 = scmp.eq.s32.totalorder %s21, 1
      %p112 = por %p110, %p111
      %p113 = scmp.ne.s32.totalorder %s104, %s105
      %p114 = scmp.eq.s32.totalorder %s21, 0
      %p115 = por %p113, %p114
      %p116 = scmp.ne.s32.totalorder %s104, %s105
      %p117 = scmp.eq.s32.totalorder %s22, 1
      %p118 = por %p116, %p117
      %p120 = scmp.ne.s32.totalorder %s105, %s119
      %p121 = scmp.eq.s32.totalorder %s22, 0
      %p122 = por %p120, %p121
      %s124 = sadd.s32 %s123, 1
      %p127 = scmp.eq.s32.totalorder %s16, 1
      %p128 = scmp.ne.s32.totalorder %s123, %s125
      %p129 = scmp.eq.s32.totalorder %s16, 0
      %p130 = por %p128, %p129
      %p131 = scmp.ne.s32.totalorder %s123, %s125
      %p132 = scmp.eq.s32.totalorder %s21, 1
      %p133 = por %p131, %p132
      %p134 = scmp.ne.s32.totalorder %s125, %s126
      %p135 = scmp.eq.s32.totalorder %s21, 0
      %p136 = por %p134, %p135
      %p137 = scmp.ne.s32.totalorder %s125, %s126
      %p138 = scmp.eq.s32.totalorder %s22, 1
      %p139 = por %p137, %p138
      %p141 = scmp.ne.s32.totalorder %s126, %s140
      %p142 = scmp.eq.s32.totalorder %s22, 0
      %p143 = por %p141, %p142
      %s145 = sadd.s32 %s144, 1
      %p148 = scmp.eq.s32.totalorder %s16, 1
      %p149 = scmp.ne.s32.totalorder %s144, %s146
      %p150 = scmp.eq.s32.totalorder %s16, 0
      %p151 = por %p149, %p150
      %p152 = scmp.ne.s32.totalorder %s144, %s146
      %p153 = scmp.eq.s32.totalorder %s21, 1
      %p154 = por %p152, %p153
      %p155 = scmp.ne.s32.totalorder %s146, %s147
      %p156 = scmp.eq.s32.totalorder %s21, 0
      %p157 = por %p155, %p156
      %p158 = scmp.ne.s32.totalorder %s146, %s147
      %p159 = scmp.eq.s32.totalorder %s22, 1
      %p160 = por %p158, %p159
      %p162 = scmp.ne.s32.totalorder %s147, %s161
      %p163 = scmp.eq.s32.totalorder %s22, 0
      %p164 = por %p162, %p163
      %s166 = sadd.s32 %s165, 1
      %p169 = scmp.eq.s32.totalorder %s16, 1
      %p170 = scmp.ne.s32.totalorder %s165, %s167
      %p171 = scmp.eq.s32.totalorder %s16, 0
      %p172 = por %p170, %p171
      %p173 = scmp.ne.s32.totalorder %s165, %s167
      %p174 = scmp.eq.s32.totalorder %s21, 1
      %p175 = por %p173, %p174
      %p176 = scmp.ne.s32.totalorder %s167, %s168
      %p177 = scmp.eq.s32.totalorder %s21, 0
      %p178 = por %p176, %p177
      %p179 = scmp.ne.s32.totalorder %s167, %s168
      %p180 = scmp.eq.s32.totalorder %s22, 1
      %p181 = por %p179, %p180
      %p183 = scmp.ne.s32.totalorder %s168, %s182
      %p184 = scmp.eq.s32.totalorder %s22, 0
      %p185 = por %p183, %p184
      %s186 = ssub.s32 %s16, %s23
      %p187 = scmp.eq.s32.totalorder %s186, 0
      %s189 = sadd.s32 %s188, 1
      %s190 = scalar_select %p187, %s188, %s189
      %p193 = pneg %p187
      %p194 = scmp.eq.s32.totalorder %s16, 1
      %p195 = por %p193, %p194
      %p196 = scmp.ne.s32.totalorder %s188, %s191
      %p197 = scmp.eq.s32.totalorder %s16, 0
      %p198 = por %p196, %p197
      %p199 = scmp.ne.s32.totalorder %s188, %s191
      %p200 = scmp.eq.s32.totalorder %s21, 1
      %p201 = por %p199, %p200
      %p202 = scmp.ne.s32.totalorder %s191, %s192
      %p203 = scmp.eq.s32.totalorder %s21, 0
      %p204 = por %p202, %p203
      %p205 = scmp.ne.s32.totalorder %s191, %s192
      %p206 = scmp.eq.s32.totalorder %s22, 1
      %p207 = por %p205, %p206
      %p209 = scmp.ne.s32.totalorder %s192, %s208
      %p210 = scmp.eq.s32.totalorder %s22, 0
      %p211 = por %p209, %p210
      %p212 = scmp.le.s32.totalorder 1, %s16
      %p213 = scmp.lt.s32.totalorder %s16, 3
      %p214 = pnand %p212, %p213
      %p215 = pneg %p214
      // Predicated region
      $region9: #{_user_tower_pallas.1} parent=5 // pred_check
        _
      $region10: #{_user_tower_pallas.1} parent=5 // pred_check_branch
        %217 = sbr.rel (%p214) target = $region12
      $region11: #{_user_tower_pallas.1} parent=5 // pred_region
        %s218 = ssub.s32 %s16, 1
        // Predicated region
        $region13: #{_user_tower_pallas.1} parent=11 // pred_check
          %p219 = pneg %p115
        $region14: #{_user_tower_pallas.1} parent=11 // pred_check_branch
          %221 = sbr.rel (%p219) target = $region16
        $region15: #{_user_tower_pallas.1} parent=11 // pred_region
          _
        $region16: #{_user_tower_pallas.1} parent=11 // pred_fallthru
          _
        // Predicated region
        $region17: #{_user_tower_pallas.1} parent=11 // pred_check
          %p222 = pneg %p136
        $region18: #{_user_tower_pallas.1} parent=11 // pred_check_branch
          %224 = sbr.rel (%p222) target = $region20
        $region19: #{_user_tower_pallas.1} parent=11 // pred_region
          _
        $region20: #{_user_tower_pallas.1} parent=11 // pred_fallthru
          _
        // Predicated region
        $region21: #{_user_tower_pallas.1} parent=11 // pred_check
          %p225 = pneg %p157
        $region22: #{_user_tower_pallas.1} parent=11 // pred_check_branch
          %227 = sbr.rel (%p225) target = $region24
        $region23: #{_user_tower_pallas.1} parent=11 // pred_region
          _
        $region24: #{_user_tower_pallas.1} parent=11 // pred_fallthru
          _
        // Predicated region
        $region25: #{_user_tower_pallas.1} parent=11 // pred_check
          %p228 = pneg %p178
        $region26: #{_user_tower_pallas.1} parent=11 // pred_check_branch
          %230 = sbr.rel (%p228) target = $region28
        $region27: #{_user_tower_pallas.1} parent=11 // pred_region
          _
        $region28: #{_user_tower_pallas.1} parent=11 // pred_fallthru
          _
      $region12: #{_user_tower_pallas.1} parent=5 // pred_fallthru
        _
      %p231 = scmp.lt.s32.totalorder %s16, 2
      // Predicated region
      $region29: #{_user_tower_pallas.1} parent=5 // pred_check
        %p232 = pneg %p231
      $region30: #{_user_tower_pallas.1} parent=5 // pred_check_branch
        %234 = sbr.rel (%p232) target = $region32
      $region31: #{_user_tower_pallas.1} parent=5 // pred_region
        // Predicated region
        $region33: #{_user_tower_pallas.1} parent=31 // pred_check
          %p235 = pneg %p36
        $region34: #{_user_tower_pallas.1} parent=31 // pred_check_branch
          %237 = sbr.rel (%p235) target = $region36
        $region35: #{_user_tower_pallas.1} parent=31 // pred_region
          %s238 = smul.u32 2, %s16
          %p239 = scmp.lt.s32.totalorder %s238, 3
          %s240 = scalar_select %p239, %s238, 3
          %s241 = smul.addr %s240, 8
          %s242 = scalar_lea.vmem %s0, %s241
          %s243 = smul.u32 2, %s16
        $region36: #{_user_tower_pallas.1} parent=31 // pred_fallthru
          _
        // Predicated region
        $region37: #{_user_tower_pallas.1} parent=31 // pred_check
          %p244 = pneg %p62
        $region38: #{_user_tower_pallas.1} parent=31 // pred_check_branch
          %246 = sbr.rel (%p244) target = $region40
        $region39: #{_user_tower_pallas.1} parent=31 // pred_region
          %s247 = smul.u32 2, %s16
          %p248 = scmp.lt.s32.totalorder %s247, 3
          %s249 = scalar_select %p248, %s247, 3
          %s250 = smul.addr %s249, 8
          %s251 = scalar_lea.vmem %s1, %s250
          %s252 = smul.u32 2, %s16
        $region40: #{_user_tower_pallas.1} parent=31 // pred_fallthru
          _
        // Predicated region
        $region41: #{_user_tower_pallas.1} parent=31 // pred_check
          %p253 = pneg %p88
        $region42: #{_user_tower_pallas.1} parent=31 // pred_check_branch
          %255 = sbr.rel (%p253) target = $region44
        $region43: #{_user_tower_pallas.1} parent=31 // pred_region
          %s256 = smul.u32 2, %s16
          %p257 = scmp.lt.s32.totalorder %s256, 3
          %s258 = scalar_select %p257, %s256, 3
          %s259 = smul.addr %s258, 8
          %s260 = scalar_lea.vmem %s2, %s259
          %s261 = smul.u32 2, %s16
        $region44: #{_user_tower_pallas.1} parent=31 // pred_fallthru
          _
      $region32: #{_user_tower_pallas.1} parent=5 // pred_fallthru
        _
      %p262 = scmp.le.s32.totalorder 1, %s16
      %p263 = scmp.lt.s32.totalorder %s16, 3
      %p264 = pnand %p262, %p263
      %p265 = pneg %p264
      // Predicated region
      $region45: #{_user_tower_pallas.1} parent=5 // pred_check
        _
      $region46: #{_user_tower_pallas.1} parent=5 // pred_check_branch
        %267 = sbr.rel (%p264) target = $region48
      $region47: #{_user_tower_pallas.1} parent=5 // pred_region
        %s268 = ssub.s32 %s16, 1
        %s269 = smul.u32 2, %s21
        %p270 = scmp.lt.s32.totalorder %s269, 3
        %s271 = scalar_select %p270, %s269, 3
        %s272 = smul.addr %s271, 8
        %s273 = scalar_lea.vmem %s0, %s272
        %p274 = pneg %p42
        %p275 = pneg %p39
        %s276 = smul.u32 2, %s21
        %p277 = scmp.lt.s32.totalorder %s276, 3
        %s278 = scalar_select %p277, %s276, 3
        %s279 = smul.addr %s278, 8
        %s280 = scalar_lea.vmem %s1, %s279
        %p281 = pneg %p68
        %p282 = pneg %p65
        %s283 = smul.u32 2, %s21
        %p284 = scmp.lt.s32.totalorder %s283, 3
        %s285 = scalar_select %p284, %s283, 3
        %s286 = smul.addr %s285, 8
        %s287 = scalar_lea.vmem %s2, %s286
        %p288 = pneg %p94
        %p289 = pneg %p91
        %p290 = pneg %p115
        %p291 = pneg %p112
        %p292 = pneg %p136
        %p293 = pneg %p133
        %p294 = pneg %p157
        %p295 = pneg %p154
        %p296 = pneg %p178
        %p297 = pneg %p175
        %p298 = pneg %p204
        %p299 = pneg %p201
        %s300 = sand.u32 %s191, 1
        %s301 = scalar_lea.sflag [#allocation3], %s300
        %s302 = sand.u32 %s191, 1
        %s303 = smul.addr %s302, 16
        %s304 = scalar_lea.vmem [#allocation2], %s303
        %s305 = smul.u32 2, %s21
        %p306 = scmp.lt.s32.totalorder %s305, 3
        %s307 = scalar_select %p306, %s305, 3
        %s308 = smul.addr %s307, 8
        %s309 = scalar_lea.vmem %s0, %s308
        %s310 = smul.u32 2, %s21
        %s311 = smul.u32 2, %s21
        %p312 = scmp.lt.s32.totalorder %s311, 3
        %s313 = scalar_select %p312, %s311, 3
        %s314 = smul.addr %s313, 8
        %s315 = scalar_lea.vmem %s1, %s314
        %s316 = smul.u32 2, %s21
        %s317 = smul.u32 2, %s21
        %p318 = scmp.lt.s32.totalorder %s317, 3
        %s319 = scalar_select %p318, %s317, 3
        %s320 = smul.addr %s319, 8
        %s321 = scalar_lea.vmem %s2, %s320
        %s322 = smul.u32 2, %s21
        %s323 = smul.u32 2, %s21
        %v324 = vlaneseq
        %v325 = vand.u32 %v324, 127
        %v326 = vld [vmem:[%s309] sm:$0xff]
        %v327 = vld [vmem:[%s309 + $0x8] sm:$0xff]
        %328 = vset.pattern.permute.xlu0 0
        %329 = vperm.xlu0 %328, %v326
        %v330 = vpop.permute.xlu0 %329
        %331 = vset.pattern.permute.xlu0 0
        %332 = vperm.xlu0 %331, %v327
        %v333 = vpop.permute.xlu0 %332
        %vm334 = vcmp.eq.s32.totalorder %v325, %v330
        %vm335 = vcmp.eq.s32.totalorder %v325, %v333
        %v336 = vld [vmem:[%s315] sm:$0xff]
        %v337 = vld [vmem:[%s315 + $0x8] sm:$0xff]
        %338 = vset.pattern.permute.xlu0 0
        %339 = vperm.xlu0 %338, %v336
        %v340 = vpop.permute.xlu0 %339
        %341 = vset.pattern.permute.xlu0 0
        %342 = vperm.xlu0 %341, %v337
        %v343 = vpop.permute.xlu0 %342
        %vm344 = vcmp.eq.s32.totalorder %v325, %v340
        %vm345 = vcmp.eq.s32.totalorder %v325, %v343
        %vm346 = vmor %vm334, %vm344
        %vm347 = vmor %vm335, %vm345
        %v348 = vld [vmem:[%s321] sm:$0xff]
        %v349 = vld [vmem:[%s321 + $0x8] sm:$0xff]
        %350 = vset.pattern.permute.xlu0 0
        %351 = vperm.xlu0 %350, %v348
        %v352 = vpop.permute.xlu0 %351
        %353 = vset.pattern.permute.xlu0 0
        %354 = vperm.xlu0 %353, %v349
        %v355 = vpop.permute.xlu0 %354
        %vm356 = vcmp.eq.s32.totalorder %v325, %v352
        %vm357 = vcmp.eq.s32.totalorder %v325, %v355
        %vm358 = vmor %vm346, %vm356
        %vm359 = vmor %vm347, %vm357
        %v360 = vsel %vm358, 1, 0
        %v361 = vsel %vm359, 1, 0
        %v362 = vcvt.s32.f32 %v360
        %v363 = vcvt.s32.f32 %v361
        %v364 = vld [vmem:[%s3] sm:$0xff]
        %v365 = vld [vmem:[%s3 + $0x8] sm:$0xff]
        %v366 = vld [vmem:[%s3 + $0x10] sm:$0xff]
        %v367 = vld [vmem:[%s3 + $0x18] sm:$0xff]
        %v368 = vld [vmem:[%s3 + $0x20] sm:$0xff]
        %v369 = vld [vmem:[%s4] sm:$0x1]
        %v371 = vlaneseq
        %v372 = vshrl.u32 %v371, 7
        %v373 = vsub.s32 0, %v372
        %v374 = vrot.slane %v369, %v373
        %vm376 = vcmask 326656
        %v378 = vsel %vm376, %v362, 0
        %v381 = vsel %vm376, %v363, 0
        %383 = vmatprep.subr.mxu0 0.0
        %384 = vmatpush1.msra.mxu0 %v364
        %385 = vmatprep.subr.mxu0 0.0
        %386 = vmatpush1.msra.mxu0 %v365
        %387 = vmatprep.subr.mxu0 0.0
        %388 = vmatpush1.msra.mxu0 %v366
        %389 = vmatprep.subr.mxu0 0.0
        %390 = vmatpush1.msra.mxu0 %v367
        %391 = vmatprep.subr.mxu0 0.0
        %392 = vmatpush1.msra.mxu0 %v368
        %393 = vmatprep.subr.mxu0 0.0
        %394 = vmatpush1.msra.mxu0 0.0
        %395 = vmatprep.subr.mxu0 0.0
        %396 = vmatpush1.msra.mxu0 0.0
        %397 = vmatprep.subr.mxu0 0.0
        %398 = vmatpush1.msra.mxu0 0.0
        %399 = vmatprep.subr.mxu0 0.0
        %400 = vmatpush1.msra.mxu0 0.0
        %401 = vmatprep.subr.mxu0 0.0
        %402 = vmatpush1.msra.mxu0 0.0
        %403 = vmatprep.subr.mxu0 0.0
        %404 = vmatpush1.msra.mxu0 0.0
        %405 = vmatprep.subr.mxu0 0.0
        %406 = vmatpush1.msra.mxu0 0.0
        %407 = vmatprep.subr.mxu0 0.0
        %408 = vmatpush1.msra.mxu0 0.0
        %409 = vmatprep.subr.mxu0 0.0
        %410 = vmatpush1.msra.mxu0 0.0
        %411 = vmatprep.subr.mxu0 0.0
        %412 = vmatpush1.msra.mxu0 0.0
        %413 = vmatprep.subr.mxu0 0.0
        %414 = vmatpush1.msra.mxu0 0.0
        %415 = vmatprep.subr.mxu0 0.0
        %416 = vmatpush1.msra.mxu0 0.0
        %417 = vmatprep.subr.mxu0 0.0
        %418 = vmatpush1.msra.mxu0 0.0
        %419 = vmatprep.subr.mxu0 0.0
        %420 = vmatpush1.msra.mxu0 0.0
        %421 = vmatprep.subr.mxu0 0.0
        %422 = vmatpush1.msra.mxu0 0.0
        %423 = vmatprep.subr.mxu0 0.0
        %424 = vmatpush1.msra.mxu0 0.0
        %425 = vmatprep.subr.mxu0 0.0
        %426 = vmatpush1.msra.mxu0 0.0
        %427 = vmatprep.subr.mxu0 0.0
        %428 = vmatpush1.msra.mxu0 0.0
        %429 = vmatprep.subr.mxu0 0.0
        %430 = vmatpush1.msra.mxu0 0.0
        %431 = vmatprep.subr.mxu0 0.0
        %432 = vmatpush1.msra.mxu0 0.0
        %433 = vmatprep.subr.mxu0 0.0
        %434 = vmatpush1.msra.mxu0 0.0
        %435 = vmatprep.subr.mxu0 0.0
        %436 = vmatpush1.msra.mxu0 0.0
        %437 = vmatprep.subr.mxu0 0.0
        %438 = vmatpush1.msra.mxu0 0.0
        %439 = vmatprep.subr.mxu0 0.0
        %440 = vmatpush1.msra.mxu0 0.0
        %441 = vmatprep.subr.mxu0 0.0
        %442 = vmatpush1.msra.mxu0 0.0
        %443 = vmatprep.subr.mxu0 0.0
        %444 = vmatpush1.msra.mxu0 0.0
        %445 = vmatprep.subr.mxu0 0.0
        %446 = vmatpush1.msra.mxu0 0.0
        %447 = vmatprep.mubr.f32.mxu0 0.0
        %448 = vmatmul.mubr.f32.gmra.mrb[0].mxu0 %v378
        %v449 = vpop.f32.mrb[0].mxu0
        %v450 = vadd.f32 %v374, %v449
        %v451 = vpop.f32.mrb[0].mxu0
        %452 = vmatprep.mubr.f32.mxu0 0.0
        %453 = vmatmul.mubr.f32.gmra.mrb[0].mxu0 %v381
        %v454 = vpop.f32.mrb[0].mxu0
        %v455 = vadd.f32 %v374, %v454
        %v456 = vpop.f32.mrb[0].mxu0
        %457 = vdwg.mxu0
        %v458 = vmax.f32 %v450, 0.0
        %v459 = vmax.f32 %v455, 0.0
        %v460 = vld [vmem:[%s5] sm:$0xff]
        %v461 = vld [vmem:[%s5 + $0x8] sm:$0xff]
        %v462 = vld [vmem:[%s5 + $0x10] sm:$0xff]
        %v463 = vld [vmem:[%s5 + $0x18] sm:$0xff]
        %v464 = vld [vmem:[%s5 + $0x20] sm:$0xff]
        %v465 = vld [vmem:[%s5 + $0x28] sm:$0xff]
        %v466 = vld [vmem:[%s5 + $0x30] sm:$0xff]
        %v467 = vld [vmem:[%s5 + $0x38] sm:$0xff]
        %v468 = vld [vmem:[%s5 + $0x40] sm:$0xff]
        %v469 = vld [vmem:[%s5 + $0x48] sm:$0xff]
        %v470 = vld [vmem:[%s5 + $0x50] sm:$0xff]
        %v471 = vld [vmem:[%s5 + $0x58] sm:$0xff]
        %v472 = vld [vmem:[%s5 + $0x60] sm:$0xff]
        %v473 = vld [vmem:[%s5 + $0x68] sm:$0xff]
        %v474 = vld [vmem:[%s5 + $0x70] sm:$0xff]
        %v475 = vld [vmem:[%s5 + $0x78] sm:$0xff]
        %v476 = vld [vmem:[%s6] sm:$0x1]
        %v478 = vlaneseq
        %v479 = vshrl.u32 %v478, 7
        %v480 = vsub.s32 0, %v479
        %v481 = vrot.slane %v476, %v480
        %483 = vmatprep.subr.mxu0 0.0
        %484 = vmatpush1.msra.mxu0 %v460
        %485 = vmatprep.subr.mxu0 0.0
        %486 = vmatpush1.msra.mxu0 %v461
        %487 = vmatprep.subr.mxu0 0.0
        %488 = vmatpush1.msra.mxu0 %v462
        %489 = vmatprep.subr.mxu0 0.0
        %490 = vmatpush1.msra.mxu0 %v463
        %491 = vmatprep.subr.mxu0 0.0
        %492 = vmatpush1.msra.mxu0 %v464
        %493 = vmatprep.subr.mxu0 0.0
        %494 = vmatpush1.msra.mxu0 %v465
        %495 = vmatprep.subr.mxu0 0.0
        %496 = vmatpush1.msra.mxu0 %v466
        %497 = vmatprep.subr.mxu0 0.0
        %498 = vmatpush1.msra.mxu0 %v467
        %499 = vmatprep.subr.mxu0 0.0
        %500 = vmatpush1.msra.mxu0 %v468
        %501 = vmatprep.subr.mxu0 0.0
        %502 = vmatpush1.msra.mxu0 %v469
        %503 = vmatprep.subr.mxu0 0.0
        %504 = vmatpush1.msra.mxu0 %v470
        %505 = vmatprep.subr.mxu0 0.0
        %506 = vmatpush1.msra.mxu0 %v471
        %507 = vmatprep.subr.mxu0 0.0
        %508 = vmatpush1.msra.mxu0 %v472
        %509 = vmatprep.subr.mxu0 0.0
        %510 = vmatpush1.msra.mxu0 %v473
        %511 = vmatprep.subr.mxu0 0.0
        %512 = vmatpush1.msra.mxu0 %v474
        %513 = vmatprep.subr.mxu0 0.0
        %514 = vmatpush1.msra.mxu0 %v475
        %515 = vmatprep.subr.mxu0 0.0
        %516 = vmatpush1.msra.mxu0 0.0
        %517 = vmatprep.subr.mxu0 0.0
        %518 = vmatpush1.msra.mxu0 0.0
        %519 = vmatprep.subr.mxu0 0.0
        %520 = vmatpush1.msra.mxu0 0.0
        %521 = vmatprep.subr.mxu0 0.0
        %522 = vmatpush1.msra.mxu0 0.0
        %523 = vmatprep.subr.mxu0 0.0
        %524 = vmatpush1.msra.mxu0 0.0
        %525 = vmatprep.subr.mxu0 0.0
        %526 = vmatpush1.msra.mxu0 0.0
        %527 = vmatprep.subr.mxu0 0.0
        %528 = vmatpush1.msra.mxu0 0.0
        %529 = vmatprep.subr.mxu0 0.0
        %530 = vmatpush1.msra.mxu0 0.0
        %531 = vmatprep.subr.mxu0 0.0
        %532 = vmatpush1.msra.mxu0 0.0
        %533 = vmatprep.subr.mxu0 0.0
        %534 = vmatpush1.msra.mxu0 0.0
        %535 = vmatprep.subr.mxu0 0.0
        %536 = vmatpush1.msra.mxu0 0.0
        %537 = vmatprep.subr.mxu0 0.0
        %538 = vmatpush1.msra.mxu0 0.0
        %539 = vmatprep.subr.mxu0 0.0
        %540 = vmatpush1.msra.mxu0 0.0
        %541 = vmatprep.subr.mxu0 0.0
        %542 = vmatpush1.msra.mxu0 0.0
        %543 = vmatprep.subr.mxu0 0.0
        %544 = vmatpush1.msra.mxu0 0.0
        %545 = vmatprep.subr.mxu0 0.0
        %546 = vmatpush1.msra.mxu0 0.0
        %547 = vmatprep.mubr.f32.mxu0 0.0
        %548 = vmatmul.mubr.f32.gmra.mrb[0].mxu0 %v458
        %v549 = vpop.f32.mrb[0].mxu0
        %v550 = vadd.f32 %v481, %v549
        %v551 = vpop.f32.mrb[0].mxu0
        %552 = vmatprep.mubr.f32.mxu0 0.0
        %553 = vmatmul.mubr.f32.gmra.mrb[0].mxu0 %v459
        %v554 = vpop.f32.mrb[0].mxu0
        %v555 = vadd.f32 %v481, %v554
        %v556 = vpop.f32.mrb[0].mxu0
        %557 = vdwg.mxu0
        %v558 = vmul.f32 %v550, %v550
        %v559 = vmul.f32 %v555, %v555
        %vm560 = vcmask 261120
        %v561 = vsel %vm560, %v558, 0.0
        %562 = vadd.xlane.f32.xlu0 %v561
        %v563 = vpop.xlane.xlu0 %562
        %v564 = vsel %vm560, %v559, 0.0
        %565 = vadd.xlane.f32.xlu0 %v564
        %v566 = vpop.xlane.xlu0 %565
        %v567 = vmax.f32 %v563, 1e-24
        %v568 = vmax.f32 %v566, 1e-24
        %v569 = vrsqrt.pop %v567
        %v570 = vrsqrt.pop %v568
        %v571 = vmul.f32 %v550, %v569
        %v572 = vmul.f32 %v555, %v570
        %573 = vst.msk [vmem:[%s304] sm:$0xff] %vm560, %v571
        %574 = vst.msk [vmem:[%s304 + $0x8] sm:$0xff] %vm560, %v572
        %s575 = sand.u32 %s191, 1
        %s576 = scalar_lea.sflag [#allocation3], %s575
        %s577 = sand.u32 %s191, 1
        %s578 = smul.addr %s577, 16
        %s579 = scalar_lea.vmem [#allocation2], %s578
        // Predicated region
        $region49: #{_user_tower_pallas.1} parent=47 // pred_check
          %p580 = pneg %p201
        $region50: #{_user_tower_pallas.1} parent=47 // pred_check_branch
          %582 = sbr.rel (%p580) target = $region52
        $region51: #{_user_tower_pallas.1} parent=47 // pred_region
          %s583 = smul.u32 2, %s21
          %s585 = ssub.s32 256, 256
          %586 = vsyncadd %s576, %s585
          %s587 = smul.addr %s583, 128
          %s588 = scalar_lea.hbm %s7, %s587
          %s589 = sshll.u32 %s579, 4
          %s590 = int_to_ptr.vmem [resolvable:$true] %s589
          %595 = dma.vmem_to_hbm [thread:$0]  %s590, 256, %s588, %s576, 128, 128, 8
        $region52: #{_user_tower_pallas.1} parent=47 // pred_fallthru
          _
      $region48: #{_user_tower_pallas.1} parent=5 // pred_fallthru
        _
      %p596 = scmp.le.s32.totalorder 2, %s16
      // Predicated region
      $region53: #{_user_tower_pallas.1} parent=5 // pred_check
        %p597 = pneg %p596
      $region54: #{_user_tower_pallas.1} parent=5 // pred_check_branch
        %599 = sbr.rel (%p597) target = $region56
      $region55: #{_user_tower_pallas.1} parent=5 // pred_region
        %s600 = ssub.s32 %s16, 2
        // Predicated region
        $region57: #{_user_tower_pallas.1} parent=55 // pred_check
          %p601 = pneg %p207
        $region58: #{_user_tower_pallas.1} parent=55 // pred_check_branch
          %603 = sbr.rel (%p601) target = $region60
        $region59: #{_user_tower_pallas.1} parent=55 // pred_region
          %s604 = sand.u32 %s192, 1
          %s605 = scalar_lea.sflag [#allocation3], %s604
          %s606 = sand.u32 %s192, 1
          %s607 = smul.addr %s606, 16
          %s608 = scalar_lea.vmem [#allocation2], %s607
          %609 = dma.done %s605, 256
        $region60: #{_user_tower_pallas.1} parent=55 // pred_fallthru
          _
      $region56: #{_user_tower_pallas.1} parent=5 // pred_fallthru
        _
    $region6: #{_user_tower_pallas.1} parent=1 // loop_footer
      %s20 = sadd.s32 1, %s16
    $region7: #{_user_tower_pallas.1} parent=1 // loop_footer_branch
      %15 = sbr.rel target = $region3
    $region8: #{_user_tower_pallas.1} parent=1 // loop_exit
      _
    %610 = vsyncpa [#allocation3], 1
    %s611 = scalar_lea.sflag [#allocation3], 1
    %612 = vsyncpa %s611, 1

</llo_original>
